<compile_context>
chip_gen: v6e
topology: v6e:2x2x1
jax: 0.10.0
libtpu: 0.0.40
codegen_flags: <defaults>
</compile_context>

<pallas_src>
import jax
import jax.numpy as jnp
from jax import lax
from jax.experimental import pallas as pl
from jax.experimental.pallas import tpu as pltpu

N_ATOMS = 8          # module fixes self.n_atoms = 50, but forward works for any A; keep small
N_TYPES = 10         # self.n_types
N_HIDDEN = 50        # self.n_hidden
N_HIDDEN2 = 20       # self.n_hidden2

# TODO(synk): the original module has len(CHARGES)=6 but n_types=10 (z.expand_as(x)
# would fail in torch); we zero-pad the charge vector to n_types so layer sizes match.
CHARGES = [0.0, 2.0, 5.0, 8.0, 9.0, 18.0]

TB_MAX = 16384                    # max batch (lane) tile; 2 x-buffers ~= 16 MiB here
_VMEM_LIMIT = 48 * 1024 * 1024    # <= v7x's 64 MiB physical VMEM, with headroom


def _round_up(n, m):
    return ((n + m - 1) // m) * m


def _cdiv(a, b):
    return -(-a // b)


def _charges_vec(n_types):
    z = jnp.zeros((n_types,), jnp.float32)
    z = z.at[: len(CHARGES)].set(jnp.asarray(CHARGES, jnp.float32))
    # forward's `x[:, 0] = 0` is folded here (CHARGES[0] is already 0.0).
    return z.at[0].set(0.0)


def _make_kernel(split_k):
    def kernel(x_ref, wb_ref, bh_ref, wh2_ref, bh2_ref, wt_ref, bt_ref, o_ref):
        # x_ref: [TB, A*T] natural (un-transposed) layout -- batch on sublanes.
        xv = x_ref[...]
        if split_k:
            # VPU pre-reduction of atom pairs (a, a + A/2): halves the layer-1
            # contraction K (80 -> 40) and therefore the MXU push count on
            # vex-slot-bound v6e/v7x; roughly neutral on HBM-bound v5e.
            k = xv.shape[1] // 2
            xv = xv[:, :k] + xv[:, k:]
        # Layer 1: contract dim 1 of both operands (wb . xv^T) -> [H, TB].
        # Mosaic does the small in-VMEM/XLU transpose of the x tile here; no HBM
        # transpose is needed in the wrapper.  Atom-sum + mask + charge scale are
        # folded into wb at trace time.
        h = lax.dot_general(wb_ref[...], xv, (((1,), (1,)), ((), ())),
                            preferred_element_type=jnp.float32)
        h = jnp.maximum(h + bh_ref[...], 0.0)
        # Layer 2: [H2, H] @ [H, TB] -> [H2, TB].
        h2 = jnp.dot(wh2_ref[...], h, preferred_element_type=jnp.float32)
        h2 = jnp.maximum(h2 + bh2_ref[...], 0.0)
        # Layer 3 (Linear(20, 1)): VPU multiply + sublane reduce -> lane-dense
        # (1, TB) row; no width-1 MXU pass, no masked vst.
        o_ref[...] = jnp.sum(h2 * wt_ref[...], axis=0, keepdims=True) + bt_ref[...]
    return kernel


def baseline_regressor(x, params, *, tb_max=TB_MAX):
    """x: [batch, n_atoms, n_types] float32 -> [batch, 1] float32."""
    B, A, T = x.shape
    wh, bh, wh2, bh2, wt, bt = params        # weights stored [in, out], biases [1, out]
    H = wh.shape[1]
    H2 = wh2.shape[1]
    AT = A * T

    # --- trace-time parameter folding (tiny, done once by XLA) -------------------
    z = _charges_vec(T)                       # [T]; z[0] = 0 also covers x[:, 0] = 0
    split_k = (A % 2 == 0)                    # in-kernel atom-pair pre-reduction?
    reps = (A // 2) if split_k else A
    wb = jnp.tile(wh.T * z[None, :], (1, reps))   # [H, reps*T]; col a*T+t = z[t]*wh[t,:]
    kw = reps * T
    bh_c = bh.reshape(H, 1)
    wh2_t = wh2.T                             # [H2, H]
    bh2_c = bh2.reshape(H2, 1)
    wt_c = wt.reshape(H2, 1)
    bt_c = bt.reshape(1, 1)

    # --- batch (lane) tile selection ----------------------------------------------
    # Minimise pad waste (tb = round_up(cdiv(B, nsteps), 128)) and force >= 2 grid
    # steps for non-trivial batches so v7x's two TensorCores both get work.
    nsteps = _cdiv(B, tb_max)
    if nsteps == 1 and B > 1024:
        nsteps = 2
    tb = _round_up(_cdiv(B, nsteps), 128)
    b_pad = nsteps * tb

    x2 = x.reshape(B, AT)                     # natural layout -- no HBM transpose
    if b_pad != B:
        x2 = jnp.pad(x2, ((0, b_pad - B), (0, 0)))

    out = pl.pallas_call(
        _make_kernel(split_k),
        out_shape=jax.ShapeDtypeStruct((1, b_pad), jnp.float32),
        grid_spec=pltpu.PrefetchScalarGridSpec(
            num_scalar_prefetch=0,
            grid=(nsteps,),
            in_specs=[
                pl.BlockSpec((tb, AT), lambda i: (i, 0)),    # x tile (pipelined)
                pl.BlockSpec((H, kw), lambda i: (0, 0)),     # folded W_h (resident)
                pl.BlockSpec((H, 1), lambda i: (0, 0)),
                pl.BlockSpec((H2, H), lambda i: (0, 0)),
                pl.BlockSpec((H2, 1), lambda i: (0, 0)),
                pl.BlockSpec((H2, 1), lambda i: (0, 0)),
                pl.BlockSpec((1, 1), lambda i: (0, 0)),
            ],
            out_specs=pl.BlockSpec((1, tb), lambda i: (0, i)),  # lane-dense output
        ),
        compiler_params=pltpu.CompilerParams(
            dimension_semantics=("parallel",),
            vmem_limit_bytes=_VMEM_LIMIT,
        ),
    )(x2, wb, bh_c, wh2_t, bh2_c, wt_c, bt_c)

    return out[0, :B].reshape(B, 1)


def init_params(key):
    """Deterministic init mimicking nn.Linear's U(-1/sqrt(fan_in), 1/sqrt(fan_in)).
    Weights are stored [in, out] (transposed vs torch); biases [1, out]."""
    def linear(k, fan_in, fan_out):
        kw, kb = jax.random.split(k)
        bound = 1.0 / jnp.sqrt(fan_in)
        w = jax.random.uniform(kw, (fan_in, fan_out), jnp.float32, -bound, bound)
        b = jax.random.uniform(kb, (1, fan_out), jnp.float32, -bound, bound)
        return w, b

    k1, k2, k3 = jax.random.split(key, 3)
    wh, bh = linear(k1, N_TYPES, N_HIDDEN)      # W_h : Linear(10, 50)
    wh2, bh2 = linear(k2, N_HIDDEN, N_HIDDEN2)  # W_h2: Linear(50, 20)
    wt, bt = linear(k3, N_HIDDEN2, 1)           # W_t : Linear(20, 1)
    return wh, bh, wh2, bh2, wt, bt


def reference(x, params):
    wh, bh, wh2, bh2, wt, bt = params
    z = _charges_vec(x.shape[2]).reshape(1, -1)
    s = jnp.sum(x, axis=1)
    s = s.at[:, 0].set(0.0)
    s = s * z
    h = jax.nn.relu(s @ wh + bh)
    h2 = jax.nn.relu(h @ wh2 + bh2)
    return h2 @ wt + bt


if __name__ == "__main__":
    key = jax.random.PRNGKey(0)
    kp, kx, kxb = jax.random.split(key, 3)
    params = init_params(kp)

    # Small shape consistent with the module's forward (batch, n_atoms, n_types).
    batch = 2
    x = jax.random.normal(kx, (batch, N_ATOMS, N_TYPES), jnp.float32)
    out = jax.block_until_ready(baseline_regressor(x, params))
    ref = reference(x, params)
    assert out.shape == (batch, 1), out.shape
    assert jnp.allclose(out, ref, atol=1e-4, rtol=1e-3), (out, ref)

    # Structural check of the multi-step grid (>=2 TensorCore shards) + padding path.
    xb = jax.random.normal(kxb, (3000, N_ATOMS, N_TYPES), jnp.float32)
    outb = jax.block_until_ready(baseline_regressor(xb, params))
    refb = reference(xb, params)
    assert outb.shape == (3000, 1), outb.shape
    assert jnp.allclose(outb, refb, atol=1e-2, rtol=1e-2), float(
        jnp.max(jnp.abs(outb - refb)))

    print("KERNEL_OK")
</pallas_src>

<mosaic_0001>
module attributes {stable_mosaic.version = 11 : i64} {
  func.func @kernel(%arg0: i32, %arg1: memref<128x80xf32, #tpu.memory_space<vmem>>, %arg2: memref<50x40xf32, #tpu.memory_space<vmem>>, %arg3: memref<50x1xf32, #tpu.memory_space<vmem>>, %arg4: memref<20x50xf32, #tpu.memory_space<vmem>>, %arg5: memref<20x1xf32, #tpu.memory_space<vmem>>, %arg6: memref<20x1xf32, #tpu.memory_space<vmem>>, %arg7: memref<1x1xf32, #tpu.memory_space<vmem>>, %arg8: memref<1x128xf32, #tpu.memory_space<vmem>>) attributes {dimension_semantics = [#tpu.dimension_semantics<parallel>], iteration_bounds = array<i64: 1>, scalar_prefetch = 0 : i64, scratch_operands = 0 : i64, tpu.core_type = #tpu.core_type<tc>, window_params = [{transform_indices = @transform_0, window_bounds = array<i64: 128, 80>}, {pipeline_mode = #tpu.pipeline_mode<synchronous>, transform_indices = @transform_1, window_bounds = array<i64: 50, 40>}, {pipeline_mode = #tpu.pipeline_mode<synchronous>, transform_indices = @transform_2, window_bounds = array<i64: 50, 1>}, {pipeline_mode = #tpu.pipeline_mode<synchronous>, transform_indices = @transform_3, window_bounds = array<i64: 20, 50>}, {pipeline_mode = #tpu.pipeline_mode<synchronous>, transform_indices = @transform_4, window_bounds = array<i64: 20, 1>}, {pipeline_mode = #tpu.pipeline_mode<synchronous>, transform_indices = @transform_5, window_bounds = array<i64: 20, 1>}, {pipeline_mode = #tpu.pipeline_mode<synchronous>, transform_indices = @transform_6, window_bounds = array<i64: 1, 1>}, {transform_indices = @transform_7, window_bounds = array<i64: 1, 128>}]} {
    %c0 = arith.constant 0 : index
    %c0_0 = arith.constant 0 : index
    %0 = vector.load %arg1[%c0, %c0_0] : memref<128x80xf32, #tpu.memory_space<vmem>>, vector<128x80xf32>
    %1 = vector.extract_strided_slice %0 {offsets = [0, 0], sizes = [128, 40], strides = [1, 1]} : vector<128x80xf32> to vector<128x40xf32>
    %2 = vector.extract_strided_slice %0 {offsets = [0, 40], sizes = [128, 40], strides = [1, 1]} : vector<128x80xf32> to vector<128x40xf32>
    %3 = arith.addf %1, %2 : vector<128x40xf32>
    %c0_1 = arith.constant 0 : index
    %c0_2 = arith.constant 0 : index
    %4 = vector.load %arg2[%c0_1, %c0_2] : memref<50x40xf32, #tpu.memory_space<vmem>>, vector<50x40xf32>
    %cst = arith.constant dense<0.000000e+00> : vector<50x128xf32>
    %5 = tpu.matmul %4, %3, %cst {dimension_numbers = #tpu.dot_dimension_numbers<[1], [1], [0], [0], [0, 0, 1, 0], [], []>} : vector<50x40xf32>, vector<128x40xf32>, vector<50x128xf32> -> vector<50x128xf32>
    %c0_3 = arith.constant 0 : index
    %c0_4 = arith.constant 0 : index
    %6 = vector.load %arg3[%c0_3, %c0_4] : memref<50x1xf32, #tpu.memory_space<vmem>>, vector<50x1xf32>
    %7 = vector.broadcast %6 : vector<50x1xf32> to vector<50x128xf32>
    %8 = arith.addf %5, %7 : vector<50x128xf32>
    %cst_5 = arith.constant 0.000000e+00 : f32
    %9 = vector.broadcast %cst_5 : f32 to vector<50x128xf32>
    %10 = arith.maximumf %8, %9 : vector<50x128xf32>
    %c0_6 = arith.constant 0 : index
    %c0_7 = arith.constant 0 : index
    %11 = vector.load %arg4[%c0_6, %c0_7] : memref<20x50xf32, #tpu.memory_space<vmem>>, vector<20x50xf32>
    %cst_8 = arith.constant dense<0.000000e+00> : vector<20x128xf32>
    %12 = tpu.matmul %11, %10, %cst_8 {dimension_numbers = #tpu.dot_dimension_numbers<[1], [0], [0], [1], [0, 0, 1, 1], [], []>} : vector<20x50xf32>, vector<50x128xf32>, vector<20x128xf32> -> vector<20x128xf32>
    %c0_9 = arith.constant 0 : index
    %c0_10 = arith.constant 0 : index
    %13 = vector.load %arg5[%c0_9, %c0_10] : memref<20x1xf32, #tpu.memory_space<vmem>>, vector<20x1xf32>
    %14 = vector.broadcast %13 : vector<20x1xf32> to vector<20x128xf32>
    %15 = arith.addf %12, %14 : vector<20x128xf32>
    %cst_11 = arith.constant 0.000000e+00 : f32
    %16 = vector.broadcast %cst_11 : f32 to vector<20x128xf32>
    %17 = arith.maximumf %15, %16 : vector<20x128xf32>
    %c0_12 = arith.constant 0 : index
    %c0_13 = arith.constant 0 : index
    %18 = vector.load %arg6[%c0_12, %c0_13] : memref<20x1xf32, #tpu.memory_space<vmem>>, vector<20x1xf32>
    %19 = vector.broadcast %18 : vector<20x1xf32> to vector<20x128xf32>
    %20 = arith.mulf %17, %19 : vector<20x128xf32>
    %cst_14 = arith.constant dense<0.000000e+00> : vector<128xf32>
    %21 = vector.multi_reduction <add>, %20, %cst_14 [0] : vector<20x128xf32> to vector<128xf32>
    %22 = vector.shape_cast %21 : vector<128xf32> to vector<1x128xf32>
    %c0_15 = arith.constant 0 : index
    %c0_16 = arith.constant 0 : index
    %23 = vector.load %arg7[%c0_15, %c0_16] : memref<1x1xf32, #tpu.memory_space<vmem>>, vector<1x1xf32>
    %24 = vector.broadcast %23 : vector<1x1xf32> to vector<1x128xf32>
    %25 = arith.addf %22, %24 : vector<1x128xf32>
    %c0_17 = arith.constant 0 : index
    %c0_18 = arith.constant 0 : index
    %26 = vector.load %arg8[%c0_17, %c0_18] : memref<1x128xf32, #tpu.memory_space<vmem>>, vector<1x128xf32>
    tpu.vector_store %arg8[%c0_17, %c0_18], %25 {strides = array<i32>} : memref<1x128xf32, #tpu.memory_space<vmem>>, vector<1x128xf32>,
    return
  }
  func.func @transform_0(%arg0: i32) -> (i32, i32) {
    %c0_i32 = arith.constant 0 : i32
    %c0_i32_0 = arith.constant 0 : i32
    return %arg0, %c0_i32 : i32, i32
  }
  func.func @transform_1(%arg0: i32) -> (i32, i32) {
    %c0_i32 = arith.constant 0 : i32
    %c0_i32_0 = arith.constant 0 : i32
    %c0_i32_1 = arith.constant 0 : i32
    return %c0_i32, %c0_i32_0 : i32, i32
  }
  func.func @transform_2(%arg0: i32) -> (i32, i32) {
    %c0_i32 = arith.constant 0 : i32
    %c0_i32_0 = arith.constant 0 : i32
    %c0_i32_1 = arith.constant 0 : i32
    return %c0_i32, %c0_i32_0 : i32, i32
  }
  func.func @transform_3(%arg0: i32) -> (i32, i32) {
    %c0_i32 = arith.constant 0 : i32
    %c0_i32_0 = arith.constant 0 : i32
    %c0_i32_1 = arith.constant 0 : i32
    return %c0_i32, %c0_i32_0 : i32, i32
  }
  func.func @transform_4(%arg0: i32) -> (i32, i32) {
    %c0_i32 = arith.constant 0 : i32
    %c0_i32_0 = arith.constant 0 : i32
    %c0_i32_1 = arith.constant 0 : i32
    return %c0_i32, %c0_i32_0 : i32, i32
  }
  func.func @transform_5(%arg0: i32) -> (i32, i32) {
    %c0_i32 = arith.constant 0 : i32
    %c0_i32_0 = arith.constant 0 : i32
    %c0_i32_1 = arith.constant 0 : i32
    return %c0_i32, %c0_i32_0 : i32, i32
  }
  func.func @transform_6(%arg0: i32) -> (i32, i32) {
    %c0_i32 = arith.constant 0 : i32
    %c0_i32_0 = arith.constant 0 : i32
    %c0_i32_1 = arith.constant 0 : i32
    return %c0_i32, %c0_i32_0 : i32, i32
  }
  func.func @transform_7(%arg0: i32) -> (i32, i32) {
    %c0_i32 = arith.constant 0 : i32
    %c0_i32_0 = arith.constant 0 : i32
    return %c0_i32, %arg0 : i32, i32
  }
}

</mosaic_0001>

<llo_original>
// kernel: tpu_custom_call.1
$region0: #{tpu_custom_call.1}
  #allocation0 [shape = 'u32[]', space=smem, size = 0x4, offset = 0x4, fixed_abs, tag = 'smem constant byte address 0x4 - core index']
  #allocation1 [shape = 'u32[144,128]{1,0:T(1,128)}', space=vmem, size = 0x12000, scoped, tag = 'internal scratch']
  #allocation2 [shape = 'f32[1,1]{1,0:T(1,128)S(1)}', space=vmem, size = 0x200, scoped, tag = 'scoped memory for tpu_custom_call.1']
  %s0 = inlined_call_operand.vmem [shape: f32[128,80], index: 0, kind: input, shape index: {}]
  %s1 = inlined_call_operand.vmem [shape: f32[50,40], index: 1, kind: input, shape index: {}]
  %s2 = inlined_call_operand.vmem [shape: f32[50,1], index: 2, kind: input, shape index: {}]
  %s3 = inlined_call_operand.vmem [shape: f32[20,50], index: 3, kind: input, shape index: {}]
  %s4 = inlined_call_operand.vmem [shape: f32[20,1], index: 4, kind: input, shape index: {}]
  %s5 = inlined_call_operand.vmem [shape: f32[20,1], index: 5, kind: input, shape index: {}]
  %s6 = inlined_call_operand.<no memory space> [shape: f32[1,1], index: 6, kind: input, shape index: {}]
  %s7 = inlined_call_operand.hbm [shape: f32[1,128], index: 7, kind: output, shape index: {}]
  %s8 = sld [smem:[#allocation0]]
  $region38: #{tpu_custom_call.1} parent=0
    _
  %s10 = ssub.s32 1, %s8
  %s11 = scalar_select 0, %s10, %s8
  %v12 = vstv %s6
  %13 = vst [vmem:[#allocation2] sm:$0x1] %v12
  $region1: #{tpu_custom_call.1} parent=0
    #allocation3 [shape = 'u8[512]{0}', space=vmem, size = 0x400, scoped, tag = 'output window, operand 0, single buffered']
    #allocation4 [shape = 's32[1]{0}', space=sflag, size = 0x4, scoped, tag = 'scoped memory for tpu_custom_call.1']
    %14 = vsyncpa [#allocation4], 0
    // Predicated region
    $region2: #{tpu_custom_call.1} parent=1 // pred_check
      _
    $region3: #{tpu_custom_call.1} parent=1 // pred_check_branch
      %16 = sbr.rel (0) target = $region5
    $region4: #{tpu_custom_call.1} parent=1 // pred_region
      _
    $region5: #{tpu_custom_call.1} parent=1 // pred_fallthru
      _
    // Predicated region
    $region6: #{tpu_custom_call.1} parent=1 // pred_check
      _
    $region7: #{tpu_custom_call.1} parent=1 // pred_check_branch
      %18 = sbr.rel (0) target = $region9
    $region8: #{tpu_custom_call.1} parent=1 // pred_region
      _
    $region9: #{tpu_custom_call.1} parent=1 // pred_fallthru
      _
    // Predicated region
    $region10: #{tpu_custom_call.1} parent=1 // pred_check
      _
    $region11: #{tpu_custom_call.1} parent=1 // pred_check_branch
      %20 = sbr.rel (0) target = $region13
    $region12: #{tpu_custom_call.1} parent=1 // pred_region
      _
    $region13: #{tpu_custom_call.1} parent=1 // pred_fallthru
      _
    // Predicated region
    $region14: #{tpu_custom_call.1} parent=1 // pred_check
      _
    $region15: #{tpu_custom_call.1} parent=1 // pred_check_branch
      %22 = sbr.rel (0) target = $region17
    $region16: #{tpu_custom_call.1} parent=1 // pred_region
      _
    $region17: #{tpu_custom_call.1} parent=1 // pred_fallthru
      _
    // Predicated region
    $region18: #{tpu_custom_call.1} parent=1 // pred_check
      _
    $region19: #{tpu_custom_call.1} parent=1 // pred_check_branch
      %24 = sbr.rel (0) target = $region21
    $region20: #{tpu_custom_call.1} parent=1 // pred_region
      _
    $region21: #{tpu_custom_call.1} parent=1 // pred_fallthru
      _
    // Predicated region
    $region22: #{tpu_custom_call.1} parent=1 // pred_check
      _
    $region23: #{tpu_custom_call.1} parent=1 // pred_check_branch
      %26 = sbr.rel (0) target = $region25
    $region24: #{tpu_custom_call.1} parent=1 // pred_region
      _
    $region25: #{tpu_custom_call.1} parent=1 // pred_fallthru
      _
    // Predicated region
    $region26: #{tpu_custom_call.1} parent=1 // pred_check
      _
    $region27: #{tpu_custom_call.1} parent=1 // pred_check_branch
      %28 = sbr.rel (0) target = $region29
    $region28: #{tpu_custom_call.1} parent=1 // pred_region
      _
    $region29: #{tpu_custom_call.1} parent=1 // pred_fallthru
      _
    %v29 = vld [vmem:[%s0] sm:$0xff]
    %v30 = vld [vmem:[%s0 + $0x8] sm:$0xff]
    %v31 = vld [vmem:[%s0 + $0x10] sm:$0xff]
    %v32 = vld [vmem:[%s0 + $0x18] sm:$0xff]
    %v33 = vld [vmem:[%s0 + $0x20] sm:$0xff]
    %v34 = vld [vmem:[%s0 + $0x28] sm:$0xff]
    %v35 = vld [vmem:[%s0 + $0x30] sm:$0xff]
    %v36 = vld [vmem:[%s0 + $0x38] sm:$0xff]
    %v37 = vld [vmem:[%s0 + $0x40] sm:$0xff]
    %v38 = vld [vmem:[%s0 + $0x48] sm:$0xff]
    %v39 = vld [vmem:[%s0 + $0x50] sm:$0xff]
    %v40 = vld [vmem:[%s0 + $0x58] sm:$0xff]
    %v41 = vld [vmem:[%s0 + $0x60] sm:$0xff]
    %v42 = vld [vmem:[%s0 + $0x68] sm:$0xff]
    %v43 = vld [vmem:[%s0 + $0x70] sm:$0xff]
    %v44 = vld [vmem:[%s0 + $0x78] sm:$0xff]
    %61 = vrot.lane.b32.xlu0 %v29, 88
    %v62 = vpop.permute.xlu0 %61
    %63 = vrot.lane.b32.xlu0 %v30, 88
    %v64 = vpop.permute.xlu0 %63
    %65 = vrot.lane.b32.xlu0 %v31, 88
    %v66 = vpop.permute.xlu0 %65
    %67 = vrot.lane.b32.xlu0 %v32, 88
    %v68 = vpop.permute.xlu0 %67
    %69 = vrot.lane.b32.xlu0 %v33, 88
    %v70 = vpop.permute.xlu0 %69
    %71 = vrot.lane.b32.xlu0 %v34, 88
    %v72 = vpop.permute.xlu0 %71
    %73 = vrot.lane.b32.xlu0 %v35, 88
    %v74 = vpop.permute.xlu0 %73
    %75 = vrot.lane.b32.xlu0 %v36, 88
    %v76 = vpop.permute.xlu0 %75
    %77 = vrot.lane.b32.xlu0 %v37, 88
    %v78 = vpop.permute.xlu0 %77
    %79 = vrot.lane.b32.xlu0 %v38, 88
    %v80 = vpop.permute.xlu0 %79
    %81 = vrot.lane.b32.xlu0 %v39, 88
    %v82 = vpop.permute.xlu0 %81
    %83 = vrot.lane.b32.xlu0 %v40, 88
    %v84 = vpop.permute.xlu0 %83
    %85 = vrot.lane.b32.xlu0 %v41, 88
    %v86 = vpop.permute.xlu0 %85
    %87 = vrot.lane.b32.xlu0 %v42, 88
    %v88 = vpop.permute.xlu0 %87
    %89 = vrot.lane.b32.xlu0 %v43, 88
    %v90 = vpop.permute.xlu0 %89
    %91 = vrot.lane.b32.xlu0 %v44, 88
    %v92 = vpop.permute.xlu0 %91
    %v109 = vadd.f32 %v29, %v62
    %v110 = vadd.f32 %v30, %v64
    %v111 = vadd.f32 %v31, %v66
    %v112 = vadd.f32 %v32, %v68
    %v113 = vadd.f32 %v33, %v70
    %v114 = vadd.f32 %v34, %v72
    %v115 = vadd.f32 %v35, %v74
    %v116 = vadd.f32 %v36, %v76
    %v117 = vadd.f32 %v37, %v78
    %v118 = vadd.f32 %v38, %v80
    %v119 = vadd.f32 %v39, %v82
    %v120 = vadd.f32 %v40, %v84
    %v121 = vadd.f32 %v41, %v86
    %v122 = vadd.f32 %v42, %v88
    %v123 = vadd.f32 %v43, %v90
    %v124 = vadd.f32 %v44, %v92
    %v125 = vld [vmem:[%s1] sm:$0xff]
    %v126 = vld [vmem:[%s1 + $0x8] sm:$0xff]
    %v127 = vld [vmem:[%s1 + $0x10] sm:$0xff]
    %v128 = vld [vmem:[%s1 + $0x18] sm:$0xff]
    %v129 = vld [vmem:[%s1 + $0x20] sm:$0xff]
    %v130 = vld [vmem:[%s1 + $0x28] sm:$0xff]
    %v131 = vld [vmem:[%s1 + $0x30] sm:$0x3]
    %v132 = vld [vmem:[%s2] sm:$0xff]
    %v133 = vld [vmem:[%s2 + $0x8] sm:$0xff]
    %v134 = vld [vmem:[%s2 + $0x10] sm:$0xff]
    %v135 = vld [vmem:[%s2 + $0x18] sm:$0xff]
    %v136 = vld [vmem:[%s2 + $0x20] sm:$0xff]
    %v137 = vld [vmem:[%s2 + $0x28] sm:$0xff]
    %v138 = vld [vmem:[%s2 + $0x30] sm:$0x3]
    %140 = vset.pattern.permute.xlu0 0
    %141 = vperm.xlu0 %140, %v132
    %v142 = vpop.permute.xlu0 %141
    %145 = vset.pattern.permute.xlu0 0
    %146 = vperm.xlu0 %145, %v133
    %v147 = vpop.permute.xlu0 %146
    %150 = vset.pattern.permute.xlu0 0
    %151 = vperm.xlu0 %150, %v134
    %v152 = vpop.permute.xlu0 %151
    %155 = vset.pattern.permute.xlu0 0
    %156 = vperm.xlu0 %155, %v135
    %v157 = vpop.permute.xlu0 %156
    %160 = vset.pattern.permute.xlu0 0
    %161 = vperm.xlu0 %160, %v136
    %v162 = vpop.permute.xlu0 %161
    %165 = vset.pattern.permute.xlu0 0
    %166 = vperm.xlu0 %165, %v137
    %v167 = vpop.permute.xlu0 %166
    %170 = vset.pattern.permute.xlu0 0
    %171 = vperm.xlu0 %170, %v138
    %v172 = vpop.permute.xlu0 %171
    %vm174 = vcmask 326656
    %v176 = vsel %vm174, %v125, 0
    %v179 = vsel %vm174, %v126, 0
    %v182 = vsel %vm174, %v127, 0
    %v185 = vsel %vm174, %v128, 0
    %v188 = vsel %vm174, %v129, 0
    %v191 = vsel %vm174, %v130, 0
    %v194 = vsel %vm174, %v131, 0
    %v197 = vsel %vm174, %v109, 0
    %v200 = vsel %vm174, %v110, 0
    %v203 = vsel %vm174, %v111, 0
    %v206 = vsel %vm174, %v112, 0
    %v209 = vsel %vm174, %v113, 0
    %v212 = vsel %vm174, %v114, 0
    %v215 = vsel %vm174, %v115, 0
    %v218 = vsel %vm174, %v116, 0
    %v221 = vsel %vm174, %v117, 0
    %v224 = vsel %vm174, %v118, 0
    %v227 = vsel %vm174, %v119, 0
    %v230 = vsel %vm174, %v120, 0
    %v233 = vsel %vm174, %v121, 0
    %v236 = vsel %vm174, %v122, 0
    %v239 = vsel %vm174, %v123, 0
    %v242 = vsel %vm174, %v124, 0
    %244 = vmatprep.subr.mxu0 0.0
    %245 = vmatpush1.xpose.msra.mxu0 %v242
    %246 = vmatprep.subr.mxu0 0.0
    %247 = vmatpush1.xpose.msra.mxu0 %v239
    %248 = vmatprep.subr.mxu0 0.0
    %249 = vmatpush1.xpose.msra.mxu0 %v236
    %250 = vmatprep.subr.mxu0 0.0
    %251 = vmatpush1.xpose.msra.mxu0 %v233
    %252 = vmatprep.subr.mxu0 0.0
    %253 = vmatpush1.xpose.msra.mxu0 %v230
    %254 = vmatprep.subr.mxu0 0.0
    %255 = vmatpush1.xpose.msra.mxu0 %v227
    %256 = vmatprep.subr.mxu0 0.0
    %257 = vmatpush1.xpose.msra.mxu0 %v224
    %258 = vmatprep.subr.mxu0 0.0
    %259 = vmatpush1.xpose.msra.mxu0 %v221
    %260 = vmatprep.subr.mxu0 0.0
    %261 = vmatpush1.xpose.msra.mxu0 %v218
    %262 = vmatprep.subr.mxu0 0.0
    %263 = vmatpush1.xpose.msra.mxu0 %v215
    %264 = vmatprep.subr.mxu0 0.0
    %265 = vmatpush1.xpose.msra.mxu0 %v212
    %266 = vmatprep.subr.mxu0 0.0
    %267 = vmatpush1.xpose.msra.mxu0 %v209
    %268 = vmatprep.subr.mxu0 0.0
    %269 = vmatpush1.xpose.msra.mxu0 %v206
    %270 = vmatprep.subr.mxu0 0.0
    %271 = vmatpush1.xpose.msra.mxu0 %v203
    %272 = vmatprep.subr.mxu0 0.0
    %273 = vmatpush1.xpose.msra.mxu0 %v200
    %274 = vmatprep.subr.mxu0 0.0
    %275 = vmatpush1.xpose.msra.mxu0 %v197
    %276 = vmatprep.subr.mxu0 0.0
    %277 = vmatpush2.xpose.msra.mxu0 0.0
    %278 = vmatprep.subr.mxu0 0.0
    %279 = vmatpush2.xpose.msra.mxu0 0.0
    %280 = vmatprep.subr.mxu0 0.0
    %281 = vmatpush2.xpose.msra.mxu0 0.0
    %282 = vmatprep.subr.mxu0 0.0
    %283 = vmatpush2.xpose.msra.mxu0 0.0
    %284 = vmatprep.subr.mxu0 0.0
    %285 = vmatpush2.xpose.msra.mxu0 0.0
    %286 = vmatprep.subr.mxu0 0.0
    %287 = vmatpush2.xpose.msra.mxu0 0.0
    %288 = vmatprep.subr.mxu0 0.0
    %289 = vmatpush2.xpose.msra.mxu0 0.0
    %290 = vmatprep.subr.mxu0 0.0
    %291 = vmatpush2.xpose.msra.mxu0 0.0
    %292 = vmatprep.subr.mxu0 0.0
    %293 = vmatpush2.xpose.msra.mxu0 0.0
    %294 = vmatprep.subr.mxu0 0.0
    %295 = vmatpush2.xpose.msra.mxu0 0.0
    %296 = vmatprep.subr.mxu0 0.0
    %297 = vmatpush2.xpose.msra.mxu0 0.0
    %298 = vmatprep.subr.mxu0 0.0
    %299 = vmatpush2.xpose.msra.mxu0 0.0
    %300 = vmatprep.subr.mxu0 0.0
    %301 = vmatpush2.xpose.msra.mxu0 0.0
    %302 = vmatprep.subr.mxu0 0.0
    %303 = vmatpush2.xpose.msra.mxu0 0.0
    %304 = vmatprep.subr.mxu0 0.0
    %305 = vmatpush2.xpose.msra.mxu0 0.0
    %306 = vmatprep.subr.mxu0 0.0
    %307 = vmatpush2.xpose.msra.mxu0 0.0
    %308 = vmatprep.mubr.f32.mxu0 0.0
    %309 = vmatmul.mubr.f32.gmra.mxu0 %v176
    %v310 = vpop.f32.mrf.mxu0
    %v311 = vadd.f32 %v142, %v310
    %v312 = vpop.f32.mrf.mxu0
    %313 = vmatprep.mubr.f32.mxu0 0.0
    %314 = vmatmul.mubr.f32.gmra.mxu0 %v179
    %v315 = vpop.f32.mrf.mxu0
    %v316 = vadd.f32 %v147, %v315
    %v317 = vpop.f32.mrf.mxu0
    %318 = vmatprep.mubr.f32.mxu0 0.0
    %319 = vmatmul.mubr.f32.gmra.mxu0 %v182
    %v320 = vpop.f32.mrf.mxu0
    %v321 = vadd.f32 %v152, %v320
    %v322 = vpop.f32.mrf.mxu0
    %323 = vmatprep.mubr.f32.mxu0 0.0
    %324 = vmatmul.mubr.f32.gmra.mxu0 %v185
    %v325 = vpop.f32.mrf.mxu0
    %v326 = vadd.f32 %v157, %v325
    %v327 = vpop.f32.mrf.mxu0
    %328 = vmatprep.mubr.f32.mxu0 0.0
    %329 = vmatmul.mubr.f32.gmra.mxu0 %v188
    %v330 = vpop.f32.mrf.mxu0
    %v331 = vadd.f32 %v162, %v330
    %v332 = vpop.f32.mrf.mxu0
    %333 = vmatprep.mubr.f32.mxu0 0.0
    %334 = vmatmul.mubr.f32.gmra.mxu0 %v191
    %v335 = vpop.f32.mrf.mxu0
    %v336 = vadd.f32 %v167, %v335
    %v337 = vpop.f32.mrf.mxu0
    %338 = vmatprep.mubr.f32.mxu0 0.0
    %339 = vmatmul.mubr.f32.gmra.mxu0 %v194
    %v340 = vpop.f32.mrf.mxu0
    %v341 = vadd.f32 %v172, %v340
    %v342 = vpop.f32.mrf.mxu0
    %343 = vdwg.mxu0
    %v344 = vmax.f32 %v311, 0.0
    %v345 = vmax.f32 %v316, 0.0
    %v346 = vmax.f32 %v321, 0.0
    %v347 = vmax.f32 %v326, 0.0
    %v348 = vmax.f32 %v331, 0.0
    %v349 = vmax.f32 %v336, 0.0
    %v350 = vmax.f32 %v341, 0.0
    %v351 = vld [vmem:[%s3] sm:$0xff]
    %v352 = vld [vmem:[%s3 + $0x8] sm:$0xff]
    %v353 = vld [vmem:[%s3 + $0x10] sm:$0xf]
    %v354 = vld [vmem:[%s4] sm:$0xff]
    %v355 = vld [vmem:[%s4 + $0x8] sm:$0xff]
    %v356 = vld [vmem:[%s4 + $0x10] sm:$0xf]
    %358 = vset.pattern.permute.xlu0 0
    %359 = vperm.xlu0 %358, %v354
    %v360 = vpop.permute.xlu0 %359
    %363 = vset.pattern.permute.xlu0 0
    %364 = vperm.xlu0 %363, %v355
    %v365 = vpop.permute.xlu0 %364
    %368 = vset.pattern.permute.xlu0 0
    %369 = vperm.xlu0 %368, %v356
    %v370 = vpop.permute.xlu0 %369
    %vm372 = vcmask 408576
    %v374 = vsel %vm372, %v351, 0
    %v377 = vsel %vm372, %v352, 0
    %v380 = vsel %vm372, %v353, 0
    %vm382 = vcmask 1041408
    %v384 = vsel %vm382, %v350, 0
    %386 = vmatprep.subr.mxu0 0.0
    %387 = vmatpush1.msra.mxu0 0.0
    %388 = vmatprep.subr.mxu0 0.0
    %389 = vmatpush1.msra.mxu0 0.0
    %390 = vmatprep.subr.mxu0 0.0
    %391 = vmatpush1.msra.mxu0 0.0
    %392 = vmatprep.subr.mxu0 0.0
    %393 = vmatpush1.msra.mxu0 0.0
    %394 = vmatprep.subr.mxu0 0.0
    %395 = vmatpush1.msra.mxu0 0.0
    %396 = vmatprep.subr.mxu0 0.0
    %397 = vmatpush1.msra.mxu0 0.0
    %398 = vmatprep.subr.mxu0 0.0
    %399 = vmatpush1.msra.mxu0 0.0
    %400 = vmatprep.subr.mxu0 0.0
    %401 = vmatpush1.msra.mxu0 0.0
    %402 = vmatprep.subr.mxu0 0.0
    %403 = vmatpush1.msra.mxu0 0.0
    %404 = vmatprep.subr.mxu0 0.0
    %405 = vmatpush1.msra.mxu0 %v384
    %406 = vmatprep.subr.mxu0 0.0
    %407 = vmatpush1.msra.mxu0 %v349
    %408 = vmatprep.subr.mxu0 0.0
    %409 = vmatpush1.msra.mxu0 %v348
    %410 = vmatprep.subr.mxu0 0.0
    %411 = vmatpush1.msra.mxu0 %v347
    %412 = vmatprep.subr.mxu0 0.0
    %413 = vmatpush1.msra.mxu0 %v346
    %414 = vmatprep.subr.mxu0 0.0
    %415 = vmatpush1.msra.mxu0 %v345
    %416 = vmatprep.subr.mxu0 0.0
    %417 = vmatpush1.msra.mxu0 %v344
    %418 = vmatprep.subr.mxu0 0.0
    %419 = vmatpush2.msra.mxu0 0.0
    %420 = vmatprep.subr.mxu0 0.0
    %421 = vmatpush2.msra.mxu0 0.0
    %422 = vmatprep.subr.mxu0 0.0
    %423 = vmatpush2.msra.mxu0 0.0
    %424 = vmatprep.subr.mxu0 0.0
    %425 = vmatpush2.msra.mxu0 0.0
    %426 = vmatprep.subr.mxu0 0.0
    %427 = vmatpush2.msra.mxu0 0.0
    %428 = vmatprep.subr.mxu0 0.0
    %429 = vmatpush2.msra.mxu0 0.0
    %430 = vmatprep.subr.mxu0 0.0
    %431 = vmatpush2.msra.mxu0 0.0
    %432 = vmatprep.subr.mxu0 0.0
    %433 = vmatpush2.msra.mxu0 0.0
    %434 = vmatprep.subr.mxu0 0.0
    %435 = vmatpush2.msra.mxu0 0.0
    %436 = vmatprep.subr.mxu0 0.0
    %437 = vmatpush2.msra.mxu0 0.0
    %438 = vmatprep.subr.mxu0 0.0
    %439 = vmatpush2.msra.mxu0 0.0
    %440 = vmatprep.subr.mxu0 0.0
    %441 = vmatpush2.msra.mxu0 0.0
    %442 = vmatprep.subr.mxu0 0.0
    %443 = vmatpush2.msra.mxu0 0.0
    %444 = vmatprep.subr.mxu0 0.0
    %445 = vmatpush2.msra.mxu0 0.0
    %446 = vmatprep.subr.mxu0 0.0
    %447 = vmatpush2.msra.mxu0 0.0
    %448 = vmatprep.subr.mxu0 0.0
    %449 = vmatpush2.msra.mxu0 0.0
    %450 = vmatprep.mubr.f32.mxu0 0.0
    %451 = vmatmul.mubr.f32.gmra.mxu0 %v374
    %v452 = vpop.f32.mrf.mxu0
    %v453 = vadd.f32 %v360, %v452
    %v454 = vpop.f32.mrf.mxu0
    %455 = vmatprep.mubr.f32.mxu0 0.0
    %456 = vmatmul.mubr.f32.gmra.mxu0 %v377
    %v457 = vpop.f32.mrf.mxu0
    %v458 = vadd.f32 %v365, %v457
    %v459 = vpop.f32.mrf.mxu0
    %460 = vmatprep.mubr.f32.mxu0 0.0
    %461 = vmatmul.mubr.f32.gmra.mxu0 %v380
    %v462 = vpop.f32.mrf.mxu0
    %v463 = vadd.f32 %v370, %v462
    %v464 = vpop.f32.mrf.mxu0
    %465 = vdwg.mxu0
    %v466 = vmax.f32 %v453, 0.0
    %v467 = vmax.f32 %v458, 0.0
    %v468 = vmax.f32 %v463, 0.0
    %v469 = vld [vmem:[%s5] sm:$0xff]
    %v470 = vld [vmem:[%s5 + $0x8] sm:$0xff]
    %v471 = vld [vmem:[%s5 + $0x10] sm:$0xf]
    %473 = vset.pattern.permute.xlu0 0
    %474 = vperm.xlu0 %473, %v469
    %v475 = vpop.permute.xlu0 %474
    %478 = vset.pattern.permute.xlu0 0
    %479 = vperm.xlu0 %478, %v470
    %v480 = vpop.permute.xlu0 %479
    %483 = vset.pattern.permute.xlu0 0
    %484 = vperm.xlu0 %483, %v471
    %v485 = vpop.permute.xlu0 %484
    %v487 = vmul.f32 %v466, %v475
    %v488 = vmul.f32 %v467, %v480
    %v489 = vmul.f32 %v468, %v485
    %v490 = vadd.f32 %v487, %v488
    %vm491 = vcmask 1043456
    %v492 = vsel %vm491, %v489, 0.0
    %v493 = vadd.f32 %v490, %v492
    %v494 = vrot.slane %v493, 4
    %v495 = vadd.f32 %v493, %v494
    %v496 = vrot.slane %v495, 2
    %v497 = vadd.f32 %v495, %v496
    %v498 = vrot.slane %v497, 1
    %v499 = vadd.f32 %v497, %v498
    %v500 = vld [vmem:[#allocation2] sm:$0x1]
    %502 = vset.pattern.permute.xlu0 0
    %503 = vperm.xlu0 %502, %v500
    %v504 = vpop.permute.xlu0 %503
    %v506 = vlaneseq
    %v507 = vshrl.u32 %v506, 7
    %v508 = vsub.s32 0, %v507
    %v509 = vrot.slane %v504, %v508
    %v510 = vadd.f32 %v499, %v509
    %511 = vst [vmem:[#allocation3] sm:$0x1] %v510
    // Predicated region
    $region30: #{tpu_custom_call.1} parent=1 // pred_check
      _
    $region31: #{tpu_custom_call.1} parent=1 // pred_check_branch
      %513 = sbr.rel (0) target = $region33
    $region32: #{tpu_custom_call.1} parent=1 // pred_region
      %s515 = ssub.s32 16, 16
      %516 = vsyncadd [#allocation4], %s515
      %s518 = sshll.u32 [#allocation3], 4
      %s519 = int_to_ptr.vmem [resolvable:$true] %s518
      %521 = dma.vmem_to_hbm [thread:$0]  %s519, 16, %s7, [#allocation4]
    $region33: #{tpu_custom_call.1} parent=1 // pred_fallthru
      _
    // Predicated region
    $region34: #{tpu_custom_call.1} parent=1 // pred_check
      _
    $region35: #{tpu_custom_call.1} parent=1 // pred_check_branch
      %523 = sbr.rel (0) target = $region37
    $region36: #{tpu_custom_call.1} parent=1 // pred_region
      %524 = dma.done [#allocation4], 16
    $region37: #{tpu_custom_call.1} parent=1 // pred_fallthru
      _
    %525 = vsyncpa [#allocation4], 1

</llo_original>
